<compile_context>
chip_gen: v5e
topology: v5e:2x2
jax: 0.10.0
libtpu: 0.0.40
codegen_flags: <defaults>
</compile_context>

<pallas_src>
import numpy as np
import jax
import jax.numpy as jnp
from jax.experimental import pallas as pl
from jax.experimental.pallas import tpu as pltpu


_MAX_HW_TILE = 8192                    # lane-tile cap along flattened H*W (mult. of 128)
_VMEM_FALLBACK_BYTES = 64 * 1024 * 1024


def _vmem_budget_bytes():
    """Per-core VMEM capacity if the runtime exposes it, else conservative 64 MiB."""
    try:
        info = pltpu.get_tpu_info()
        cap = getattr(info, "vmem_capacity_bytes", None)
        if cap:
            return int(cap)
    except Exception:
        pass
    return _VMEM_FALLBACK_BYTES


def _dist_vmem_limit_bytes():
    # Raise the scoped-VMEM limit well past the 16/32 MiB defaults, with headroom.
    return int(min(0.75 * _vmem_budget_bytes(), 96 * 1024 * 1024))


def _choose_hw_tile(hw, per_col_bytes, vmem_limit, max_tile):
    """Largest lane-aligned tile under both the static cap and ~half the VMEM limit."""
    fit = (vmem_limit // 2) // max(per_col_bytes, 1)
    cap = min(int(max_tile), int(fit))
    cap = max(128, (cap // 128) * 128)
    if hw <= cap:
        return hw          # single tile == full extent (always layout-legal, no tail)
    return cap             # multiple of 128; last tile handled by cdiv + in-kernel mask


# ----------------------------------------------------------------------------
# Bicubic weight matrices (deterministic host-side setup, PyTorch-exact:
# a = -0.75, align_corners=False, border replication).
# ----------------------------------------------------------------------------
def _cubic1(x, A):
    return ((A + 2.0) * x - (A + 3.0)) * x * x + 1.0


def _cubic2(x, A):
    return ((A * x - 5.0 * A) * x + 8.0 * A) * x - 4.0 * A


def bicubic_weight_matrix(in_size, out_size):
    """numpy W such that (W @ signal) == 1-D bicubic upsample, align_corners=False."""
    A = -0.75
    scale = in_size / out_size
    W = np.zeros((out_size, in_size), dtype=np.float64)
    for j in range(out_size):
        src = scale * (j + 0.5) - 0.5
        x0 = int(np.floor(src))
        t = src - x0
        coeffs = (
            _cubic2(t + 1.0, A),
            _cubic1(t, A),
            _cubic1(1.0 - t, A),
            _cubic2(2.0 - t, A),
        )
        for m, c in enumerate(coeffs):
            idx = min(max(x0 - 1 + m, 0), in_size - 1)   # border replication
            W[j, idx] += c
    return W.astype(np.float32)


# ----------------------------------------------------------------------------
# Pallas kernel 1: both 2x and 4x bicubic upsamples, grid=(N,) "parallel".
# Each step: one batch element's (h, w) slab; shared small weight matrices
# stay resident (index_map returns the same block every step).
# ----------------------------------------------------------------------------
def _upsample_pair_kernel(s_ref, wh2_ref, wwt2_ref, wh4_ref, wwt4_ref,
                          o2_ref, o4_ref):
    s = s_ref[...].astype(jnp.float32)                                     # (h, w)
    x2 = jnp.dot(s, wwt2_ref[...], preferred_element_type=jnp.float32)     # (h, 2w)
    o2_ref[...] = jnp.dot(wh2_ref[...], x2, preferred_element_type=jnp.float32)
    x4 = jnp.dot(s, wwt4_ref[...], preferred_element_type=jnp.float32)     # (h, 4w)
    o4_ref[...] = jnp.dot(wh4_ref[...], x4, preferred_element_type=jnp.float32)


def bicubic_upsample_2x_4x(S):
    """Pallas equivalent of F.interpolate(S, 2x) and 4x, mode='bicubic'."""
    N, C, h, w = S.shape
    assert C == 1
    wh2 = jnp.asarray(bicubic_weight_matrix(h, 2 * h))        # (2h, h)
    wwt2 = jnp.asarray(bicubic_weight_matrix(w, 2 * w).T)     # (w, 2w)
    wh4 = jnp.asarray(bicubic_weight_matrix(h, 4 * h))        # (4h, h)
    wwt4 = jnp.asarray(bicubic_weight_matrix(w, 4 * w).T)     # (w, 4w)

    wspec = lambda m: pl.BlockSpec(tuple(m.shape), lambda n: (0, 0))
    o2, o4 = pl.pallas_call(
        _upsample_pair_kernel,
        out_shape=(jax.ShapeDtypeStruct((N, 1, 2 * h, 2 * w), jnp.float32),
                   jax.ShapeDtypeStruct((N, 1, 4 * h, 4 * w), jnp.float32)),
        grid=(N,),
        in_specs=[pl.BlockSpec((None, None, h, w), lambda n: (n, 0, 0, 0)),
                  wspec(wh2), wspec(wwt2), wspec(wh4), wspec(wwt4)],
        out_specs=(pl.BlockSpec((None, None, 2 * h, 2 * w), lambda n: (n, 0, 0, 0)),
                   pl.BlockSpec((None, None, 4 * h, 4 * w), lambda n: (n, 0, 0, 0))),
        compiler_params=pltpu.CompilerParams(
            dimension_semantics=("parallel",)),
    )(S, wh2, wwt2, wh4, wwt4)
    return o2, o4


# ----------------------------------------------------------------------------
# Pallas kernel 2: fused weighted L1/L2 sums for ALL (a, b) pairs sharing one
# attention map S.  Grid = (batch "parallel", hw-tiles "arbitrary").  Per-pair
# lane-dense partial sums stacked along sublanes and accumulated with ONE
# full-block += into a resident (P_pad, T) VMEM output block per batch.
# ----------------------------------------------------------------------------
def _make_fused_dist_kernel(num_pairs, p_pad_rows, p, hw, tile, has_tail):
    def kernel(s_ref, *refs):
        out_ref = refs[-1]          # (P_pad, T) resident per-batch accumulator
        ab = refs[:-1]              # a0, b0, a1, b1, ...

        @pl.when(pl.program_id(1) == 0)
        def _init():
            out_ref[...] = jnp.zeros_like(out_ref)

        s = s_ref[...].astype(jnp.float32)                      # (1, T)
        if has_tail:
            t = pl.program_id(1)
            col = jax.lax.broadcasted_iota(jnp.int32, (1, tile), 1)
            valid = col < (hw - t * tile)                       # (1, T)

        parts = []
        for j in range(num_pairs):
            a = ab[2 * j][...].astype(jnp.float32)              # (C_j, T)
            b = ab[2 * j + 1][...].astype(jnp.float32)          # (C_j, T)
            d = (a - b) * s                                     # broadcast over channels
            if has_tail:
                d = jnp.where(valid, d, 0.0)                    # zero padded tail lanes
            vals = jnp.abs(d) if p == 1 else d * d
            parts.append(jnp.sum(vals, axis=0, keepdims=True))  # (1, T)
        if p_pad_rows > num_pairs:
            parts.append(jnp.zeros((p_pad_rows - num_pairs, tile), jnp.float32))
        out_ref[...] += jnp.concatenate(parts, axis=0)          # single full-block acc
    return kernel


def fused_weighted_dist_sums(pairs, s, p, max_tile=None):
    """sum_{n,c,h,w} |(a-b)*s|^p for each (a, b) pair, in ONE pallas_call.

    pairs: list of (a, b), each NCHW sharing N, H, W with s (C may differ).
    Returns f32 vector of per-pair sums, shape (len(pairs),).
    """
    N, _, H, W = s.shape
    HW = H * W
    P = len(pairs)
    P_pad = ((P + 7) // 8) * 8          # full-sublane output block (unmasked stores)

    # Per-lane-column VMEM footprint: double-buffered inputs + output block.
    bytes_per_col = s.dtype.itemsize + sum(
        (a.dtype.itemsize + b.dtype.itemsize) * int(a.shape[1]) for a, b in pairs)
    per_col = 2 * bytes_per_col + 2 * P_pad * 4
    vmem_limit = _dist_vmem_limit_bytes()
    T = _choose_hw_tile(HW, per_col, vmem_limit,
                        _MAX_HW_TILE if max_tile is None else max_tile)
    num_t = pl.cdiv(HW, T)
    has_tail = (HW % T) != 0

    ins = [s.reshape(N, 1, HW)]
    in_specs = [pl.BlockSpec((None, 1, T), lambda n, t: (n, 0, t))]
    for a, b in pairs:
        C = int(a.shape[1])
        ins += [a.reshape(N, C, HW), b.reshape(N, C, HW)]   # reshape = free view
        spec = pl.BlockSpec((None, C, T), lambda n, t: (n, 0, t))
        in_specs += [spec, spec]

    partial = pl.pallas_call(
        _make_fused_dist_kernel(P, P_pad, p, HW, T, has_tail),
        out_shape=jax.ShapeDtypeStruct((N, P_pad, T), jnp.float32),
        grid=(N, num_t),
        in_specs=in_specs,
        out_specs=pl.BlockSpec((None, P_pad, T), lambda n, t: (n, 0, 0)),
        compiler_params=pltpu.CompilerParams(
            dimension_semantics=("parallel", "arbitrary"),
            vmem_limit_bytes=vmem_limit),
    )(*ins)
    return jnp.sum(partial, axis=(0, 2))[:P]                  # (P,)


# ----------------------------------------------------------------------------
# Module equivalent
# ----------------------------------------------------------------------------
class TPerceptualLoss:
    def __init__(self, use_S=True, type='l2'):
        # NOTE: in the PyTorch module the use_S sigmoid branch is immediately
        # overwritten by the raw S / interpolated S, so use_S has no effect on
        # the returned value; we implement the effective semantics.
        self.use_S = use_S
        self.type = type

    def __call__(self, map_lv3, map_lv2, map_lv1, sr_skips, S,
                 T_lv3, T_lv2, T_lv1, skips_T):
        p = 1 if self.type == 'l1' else 2
        S_lv3 = S
        S_lv2, S_lv1 = bicubic_upsample_2x_4x(S)

        pairs3 = [(map_lv3, T_lv3)] + [
            (sr_skips['pool2'][i], skips_T['T_lv3'][i]) for i in range(3)]
        pairs2 = [(map_lv2, T_lv2)] + [
            (sr_skips['pool1'][i], skips_T['T_lv2'][i]) for i in range(3)]
        pairs1 = [(map_lv1, T_lv1)]

        sums3 = fused_weighted_dist_sums(pairs3, S_lv3, p)
        sums2 = fused_weighted_dist_sums(pairs2, S_lv2, p)
        sums1 = fused_weighted_dist_sums(pairs1, S_lv1, p)

        cnt = lambda prs: jnp.asarray([float(a.size) for a, _ in prs], jnp.float32)
        means3 = sums3 / cnt(pairs3)
        means2 = sums2 / cnt(pairs2)
        means1 = sums1 / cnt(pairs1)

        loss_texture = (means3[0] + means2[0] + means1[0]) / 3.0
        loss_texture1 = (jnp.sum(means3[1:]) + jnp.sum(means2[1:])) / 6.0
        return loss_texture, loss_texture1


# ----------------------------------------------------------------------------
# Pure-JAX reference (PyTorch op order: a*s - b*s) for validation.
# ----------------------------------------------------------------------------
def _ref_upsample(S, factor):
    N, C, h, w = S.shape
    Wh = jnp.asarray(bicubic_weight_matrix(h, h * factor))
    Ww = jnp.asarray(bicubic_weight_matrix(w, w * factor))
    return jnp.einsum('ah,nchw,bw->ncab', Wh, S.astype(jnp.float32), Ww)


def _ref_dist(a, b, s, p):
    d = a.astype(jnp.float32) * s - b.astype(jnp.float32) * s
    return jnp.mean(jnp.abs(d)) if p == 1 else jnp.mean(d * d)


def _ref_loss(map_lv3, map_lv2, map_lv1, sr_skips, S,
              T_lv3, T_lv2, T_lv1, skips_T, loss_type):
    S_lv3 = S.astype(jnp.float32)
    S_lv2 = _ref_upsample(S, 2)
    S_lv1 = _ref_upsample(S, 4)
    p = 1 if loss_type == 'l1' else 2
    lt = _ref_dist(map_lv3, T_lv3, S_lv3, p)
    lt += _ref_dist(map_lv2, T_lv2, S_lv2, p)
    lt1 = 0.0
    for i in (0, 1, 2):
        lt1 += _ref_dist(sr_skips['pool2'][i], skips_T['T_lv3'][i], S_lv3, p)
        lt1 += _ref_dist(sr_skips['pool1'][i], skips_T['T_lv2'][i], S_lv2, p)
    lt += _ref_dist(map_lv1, T_lv1, S_lv1, p)
    return lt / 3.0, lt1 / 6.0


# ----------------------------------------------------------------------------
# Demo
# ----------------------------------------------------------------------------
if __name__ == "__main__":
    key = jax.random.PRNGKey(0)
    ks = jax.random.split(key, 20)
    rnd = lambda k, shape: jax.random.normal(k, shape, dtype=jnp.float32)

    N, H, W = 2, 8, 8                # lv3 spatial; lv2 = 2x, lv1 = 4x
    C3, C2, C1 = 8, 8, 4
    skip_ch = (4, 8, 16)

    map_lv3 = rnd(ks[0], (N, C3, H, W))
    T_lv3   = rnd(ks[1], (N, C3, H, W))
    map_lv2 = rnd(ks[2], (N, C2, 2 * H, 2 * W))
    T_lv2   = rnd(ks[3], (N, C2, 2 * H, 2 * W))
    map_lv1 = rnd(ks[4], (N, C1, 4 * H, 4 * W))
    T_lv1   = rnd(ks[5], (N, C1, 4 * H, 4 * W))
    S       = rnd(ks[6], (N, 1, H, W))

    sr_skips = {
        'pool2': [rnd(ks[7 + i], (N, skip_ch[i], H, W)) for i in range(3)],
        'pool1': [rnd(ks[10 + i], (N, skip_ch[i], 2 * H, 2 * W)) for i in range(3)],
    }
    skips_T = {
        'T_lv3': [rnd(ks[13 + i], (N, skip_ch[i], H, W)) for i in range(3)],
        'T_lv2': [rnd(ks[16 + i], (N, skip_ch[i], 2 * H, 2 * W)) for i in range(3)],
    }

    for loss_type in ('l2', 'l1'):
        mod = TPerceptualLoss(use_S=True, type=loss_type)
        lt, lt1 = mod(map_lv3, map_lv2, map_lv1, sr_skips, S,
                      T_lv3, T_lv2, T_lv1, skips_T)
        jax.block_until_ready((lt, lt1))
        rt, rt1 = _ref_loss(map_lv3, map_lv2, map_lv1, sr_skips, S,
                            T_lv3, T_lv2, T_lv1, skips_T, loss_type)
        np.testing.assert_allclose(float(lt), float(rt), rtol=1e-4, atol=1e-6)
        np.testing.assert_allclose(float(lt1), float(rt1), rtol=1e-4, atol=1e-6)

    # Exercise the cdiv + tail-mask path at small shapes (tile that does not
    # divide H*W = 1024: T = 384 -> 3 tiles, last one partial & masked).
    S1 = rnd(ks[19], (N, 1, 4 * H, 4 * W))
    got = fused_weighted_dist_sums([(map_lv1, T_lv1)], S1, 2, max_tile=384)[0]
    jax.block_until_ready(got)
    want = jnp.sum(((map_lv1 - T_lv1) * S1) ** 2)
    np.testing.assert_allclose(float(got), float(want), rtol=1e-4, atol=1e-4)

    print("KERNEL_OK")
</pallas_src>

<mosaic_0001>
module attributes {stable_mosaic.version = 11 : i64} {
  func.func @_upsample_pair_kernel(%arg0: i32, %arg1: memref<1x1x8x8xf32, #tpu.memory_space<vmem>>, %arg2: memref<16x8xf32, #tpu.memory_space<vmem>>, %arg3: memref<8x16xf32, #tpu.memory_space<vmem>>, %arg4: memref<32x8xf32, #tpu.memory_space<vmem>>, %arg5: memref<8x32xf32, #tpu.memory_space<vmem>>, %arg6: memref<1x1x16x16xf32, #tpu.memory_space<vmem>>, %arg7: memref<1x1x32x32xf32, #tpu.memory_space<vmem>>) attributes {dimension_semantics = [#tpu.dimension_semantics<parallel>], iteration_bounds = array<i64: 2>, scalar_prefetch = 0 : i64, scratch_operands = 0 : i64, tpu.core_type = #tpu.core_type<tc>, window_params = [{transform_indices = @transform_0, window_bounds = array<i64: 1, 1, 8, 8>}, {pipeline_mode = #tpu.pipeline_mode<synchronous>, transform_indices = @transform_1, window_bounds = array<i64: 16, 8>}, {pipeline_mode = #tpu.pipeline_mode<synchronous>, transform_indices = @transform_2, window_bounds = array<i64: 8, 16>}, {pipeline_mode = #tpu.pipeline_mode<synchronous>, transform_indices = @transform_3, window_bounds = array<i64: 32, 8>}, {pipeline_mode = #tpu.pipeline_mode<synchronous>, transform_indices = @transform_4, window_bounds = array<i64: 8, 32>}, {transform_indices = @transform_5, window_bounds = array<i64: 1, 1, 16, 16>}, {transform_indices = @transform_6, window_bounds = array<i64: 1, 1, 32, 32>}]} {
    %c0 = arith.constant 0 : index
    %c0_0 = arith.constant 0 : index
    %c0_1 = arith.constant 0 : index
    %c0_2 = arith.constant 0 : index
    %0 = vector.load %arg1[%c0, %c0_0, %c0_1, %c0_2] : memref<1x1x8x8xf32, #tpu.memory_space<vmem>>, vector<1x1x8x8xf32>
    %1 = vector.shape_cast %0 : vector<1x1x8x8xf32> to vector<8x8xf32>
    %c0_3 = arith.constant 0 : index
    %c0_4 = arith.constant 0 : index
    %2 = vector.load %arg3[%c0_3, %c0_4] : memref<8x16xf32, #tpu.memory_space<vmem>>, vector<8x16xf32>
    %cst = arith.constant dense<0.000000e+00> : vector<8x16xf32>
    %3 = tpu.matmul %1, %2, %cst {dimension_numbers = #tpu.dot_dimension_numbers<[1], [0], [0], [1], [0, 0, 1, 1], [], []>} : vector<8x8xf32>, vector<8x16xf32>, vector<8x16xf32> -> vector<8x16xf32>
    %c0_5 = arith.constant 0 : index
    %c0_6 = arith.constant 0 : index
    %4 = vector.load %arg2[%c0_5, %c0_6] : memref<16x8xf32, #tpu.memory_space<vmem>>, vector<16x8xf32>
    %cst_7 = arith.constant dense<0.000000e+00> : vector<16x16xf32>
    %5 = tpu.matmul %4, %3, %cst_7 {dimension_numbers = #tpu.dot_dimension_numbers<[1], [0], [0], [1], [0, 0, 1, 1], [], []>} : vector<16x8xf32>, vector<8x16xf32>, vector<16x16xf32> -> vector<16x16xf32>
    %c0_8 = arith.constant 0 : index
    %c0_9 = arith.constant 0 : index
    %c0_10 = arith.constant 0 : index
    %c0_11 = arith.constant 0 : index
    %6 = vector.load %arg6[%c0_8, %c0_9, %c0_10, %c0_11] : memref<1x1x16x16xf32, #tpu.memory_space<vmem>>, vector<1x1x16x16xf32>
    %7 = vector.shape_cast %6 : vector<1x1x16x16xf32> to vector<16x16xf32>
    %8 = vector.shape_cast %5 : vector<16x16xf32> to vector<1x1x16x16xf32>
    tpu.vector_store %arg6[%c0_8, %c0_9, %c0_10, %c0_11], %8 {strides = array<i32>} : memref<1x1x16x16xf32, #tpu.memory_space<vmem>>, vector<1x1x16x16xf32>,
    %c0_12 = arith.constant 0 : index
    %c0_13 = arith.constant 0 : index
    %9 = vector.load %arg5[%c0_12, %c0_13] : memref<8x32xf32, #tpu.memory_space<vmem>>, vector<8x32xf32>
    %cst_14 = arith.constant dense<0.000000e+00> : vector<8x32xf32>
    %10 = tpu.matmul %1, %9, %cst_14 {dimension_numbers = #tpu.dot_dimension_numbers<[1], [0], [0], [1], [0, 0, 1, 1], [], []>} : vector<8x8xf32>, vector<8x32xf32>, vector<8x32xf32> -> vector<8x32xf32>
    %c0_15 = arith.constant 0 : index
    %c0_16 = arith.constant 0 : index
    %11 = vector.load %arg4[%c0_15, %c0_16] : memref<32x8xf32, #tpu.memory_space<vmem>>, vector<32x8xf32>
    %cst_17 = arith.constant dense<0.000000e+00> : vector<32x32xf32>
    %12 = tpu.matmul %11, %10, %cst_17 {dimension_numbers = #tpu.dot_dimension_numbers<[1], [0], [0], [1], [0, 0, 1, 1], [], []>} : vector<32x8xf32>, vector<8x32xf32>, vector<32x32xf32> -> vector<32x32xf32>
    %c0_18 = arith.constant 0 : index
    %c0_19 = arith.constant 0 : index
    %c0_20 = arith.constant 0 : index
    %c0_21 = arith.constant 0 : index
    %13 = vector.load %arg7[%c0_18, %c0_19, %c0_20, %c0_21] : memref<1x1x32x32xf32, #tpu.memory_space<vmem>>, vector<1x1x32x32xf32>
    %14 = vector.shape_cast %13 : vector<1x1x32x32xf32> to vector<32x32xf32>
    %15 = vector.shape_cast %12 : vector<32x32xf32> to vector<1x1x32x32xf32>
    tpu.vector_store %arg7[%c0_18, %c0_19, %c0_20, %c0_21], %15 {strides = array<i32>} : memref<1x1x32x32xf32, #tpu.memory_space<vmem>>, vector<1x1x32x32xf32>,
    return
  }
  func.func @transform_0(%arg0: i32) -> (i32, i32, i32, i32) {
    %c0_i32 = arith.constant 0 : i32
    %c0_i32_0 = arith.constant 0 : i32
    %c0_i32_1 = arith.constant 0 : i32
    %c0_i32_2 = arith.constant 0 : i32
    return %arg0, %c0_i32, %c0_i32_0, %c0_i32_1 : i32, i32, i32, i32
  }
  func.func @transform_1(%arg0: i32) -> (i32, i32) {
    %c0_i32 = arith.constant 0 : i32
    %c0_i32_0 = arith.constant 0 : i32
    %c0_i32_1 = arith.constant 0 : i32
    return %c0_i32, %c0_i32_0 : i32, i32
  }
  func.func @transform_2(%arg0: i32) -> (i32, i32) {
    %c0_i32 = arith.constant 0 : i32
    %c0_i32_0 = arith.constant 0 : i32
    %c0_i32_1 = arith.constant 0 : i32
    return %c0_i32, %c0_i32_0 : i32, i32
  }
  func.func @transform_3(%arg0: i32) -> (i32, i32) {
    %c0_i32 = arith.constant 0 : i32
    %c0_i32_0 = arith.constant 0 : i32
    %c0_i32_1 = arith.constant 0 : i32
    return %c0_i32, %c0_i32_0 : i32, i32
  }
  func.func @transform_4(%arg0: i32) -> (i32, i32) {
    %c0_i32 = arith.constant 0 : i32
    %c0_i32_0 = arith.constant 0 : i32
    %c0_i32_1 = arith.constant 0 : i32
    return %c0_i32, %c0_i32_0 : i32, i32
  }
  func.func @transform_5(%arg0: i32) -> (i32, i32, i32, i32) {
    %c0_i32 = arith.constant 0 : i32
    %c0_i32_0 = arith.constant 0 : i32
    %c0_i32_1 = arith.constant 0 : i32
    %c0_i32_2 = arith.constant 0 : i32
    return %arg0, %c0_i32, %c0_i32_0, %c0_i32_1 : i32, i32, i32, i32
  }
  func.func @transform_6(%arg0: i32) -> (i32, i32, i32, i32) {
    %c0_i32 = arith.constant 0 : i32
    %c0_i32_0 = arith.constant 0 : i32
    %c0_i32_1 = arith.constant 0 : i32
    %c0_i32_2 = arith.constant 0 : i32
    return %arg0, %c0_i32, %c0_i32_0, %c0_i32_1 : i32, i32, i32, i32
  }
}

</mosaic_0001>

<llo_original>
// kernel: tpu_custom_call.1
$region0: #{tpu_custom_call.1}
  #allocation0 [shape = 'u32[]', space=smem, size = 0x4, offset = 0x4, fixed_abs, tag = 'smem constant byte address 0x4 - core index']
  #allocation1 [shape = 'u32[72,128]{1,0:T(1,128)}', space=vmem, size = 0x9000, scoped, tag = 'internal scratch']
  %s0 = inlined_call_operand.vmem [shape: f32[2,1,8,8], index: 0, kind: input, shape index: {}]
  %s1 = inlined_call_operand.vmem [shape: f32[16,8], index: 1, kind: input, shape index: {}]
  %s2 = inlined_call_operand.vmem [shape: f32[8,16], index: 2, kind: input, shape index: {}]
  %s3 = inlined_call_operand.vmem [shape: f32[32,8], index: 3, kind: input, shape index: {}]
  %s4 = inlined_call_operand.vmem [shape: f32[8,32], index: 4, kind: input, shape index: {}]
  %s5 = inlined_call_operand.hbm [shape: f32[2,1,16,16], index: 5, kind: output, shape index: {0}]
  %s6 = inlined_call_operand.hbm [shape: f32[2,1,32,32], index: 6, kind: output, shape index: {1}]
  %7 = xla_tuple %s5, %s6
  %s8 = sld [smem:[#allocation0]]
  $region61: #{tpu_custom_call.1} parent=0
    _
  %s10 = ssub.s32 1, %s8
  %s11 = scalar_select 0, %s10, %s8
  $region1: #{tpu_custom_call.1} parent=0
    #allocation2 [shape = 'u8[16384]{0}', space=vmem, size = 0x4000, scoped, tag = 'output window, operand 0']
    #allocation3 [shape = 's32[2]{0}', space=sflag, size = 0x8, scoped, tag = 'scoped memory for tpu_custom_call.1']
    #allocation4 [shape = 'u8[32768]{0}', space=vmem, size = 0x8000, scoped, tag = 'output window, operand 1']
    #allocation5 [shape = 's32[2]{0}', space=sflag, size = 0x8, scoped, tag = 'scoped memory for tpu_custom_call.1']
    %12 = vsyncpa [#allocation3], 0
    %s13 = scalar_lea.sflag [#allocation3], 1
    %14 = vsyncpa %s13, 0
    %15 = vsyncpa [#allocation5], 0
    %s16 = scalar_lea.sflag [#allocation5], 1
    %17 = vsyncpa %s16, 0
    loop: start=0, step=1, limit=4
    $region2: #{tpu_custom_call.1} parent=1 // loop_pre_header
      _
    $region3: #{tpu_custom_call.1} parent=1 // loop_header
      %s19 = sphi 0, %s23
      %p20 = scmp.ge.s32.totalorder %s19, 4
      %s29 = sphi 0, %s31
      %s32 = sphi 0, %s29
      %s33 = sphi 0, %s32
      %s49 = sphi 0, %s33
      %s53 = sphi 0, %s53
      %s55 = sphi 0, %s53
      %s56 = sphi 0, %s55
      %s70 = sphi 0, %s56
      %s74 = sphi 0, %s74
      %s76 = sphi 0, %s74
      %s77 = sphi 0, %s76
      %s91 = sphi 0, %s77
      %s95 = sphi 0, %s95
      %s97 = sphi 0, %s95
      %s98 = sphi 0, %s97
      %s112 = sphi 0, %s98
      %s116 = sphi 0, %s116
      %s118 = sphi 0, %s116
      %s119 = sphi 0, %s118
      %s133 = sphi 0, %s119
      %s139 = sphi 0, %s141
      %s142 = sphi 0, %s139
      %s143 = sphi 0, %s142
      %s159 = sphi 0, %s143
      %s165 = sphi 0, %s167
      %s168 = sphi 0, %s165
      %s169 = sphi 0, %s168
      %s185 = sphi 0, %s169
    $region4: #{tpu_custom_call.1} parent=1 // loop_header_branch
      %22 = sbr.rel (%p20) target = $region8
    $region5: #{tpu_custom_call.1} parent=1 // loop_body
      %s24 = ssub.s32 %s19, 1
      %s25 = ssub.s32 %s19, 2
      %s26 = sadd.s32 %s19, 1
      %s27 = ssub.s32 %s19, %s26
      %p28 = scmp.eq.s32.totalorder %s27, 0
      %s30 = sadd.s32 %s29, 1
      %s31 = scalar_select %p28, %s29, %s30
      %p34 = pneg %p28
      %p35 = scmp.eq.s32.totalorder %s19, 1
      %p36 = por %p34, %p35
      %p37 = scmp.ne.s32.totalorder %s29, %s32
      %p38 = scmp.eq.s32.totalorder %s19, 0
      %p39 = por %p37, %p38
      %p40 = scmp.ne.s32.totalorder %s29, %s32
      %p41 = scmp.eq.s32.totalorder %s24, 1
      %p42 = por %p40, %p41
      %p43 = scmp.ne.s32.totalorder %s32, %s33
      %p44 = scmp.eq.s32.totalorder %s24, 0
      %p45 = por %p43, %p44
      %p46 = scmp.ne.s32.totalorder %s32, %s33
      %p47 = scmp.eq.s32.totalorder %s25, 1
      %p48 = por %p46, %p47
      %p50 = scmp.ne.s32.totalorder %s33, %s49
      %p51 = scmp.eq.s32.totalorder %s25, 0
      %p52 = por %p50, %p51
      %s54 = sadd.s32 %s53, 1
      %p57 = scmp.eq.s32.totalorder %s19, 1
      %p58 = scmp.ne.s32.totalorder %s53, %s55
      %p59 = scmp.eq.s32.totalorder %s19, 0
      %p60 = por %p58, %p59
      %p61 = scmp.ne.s32.totalorder %s53, %s55
      %p62 = scmp.eq.s32.totalorder %s24, 1
      %p63 = por %p61, %p62
      %p64 = scmp.ne.s32.totalorder %s55, %s56
      %p65 = scmp.eq.s32.totalorder %s24, 0
      %p66 = por %p64, %p65
      %p67 = scmp.ne.s32.totalorder %s55, %s56
      %p68 = scmp.eq.s32.totalorder %s25, 1
      %p69 = por %p67, %p68
      %p71 = scmp.ne.s32.totalorder %s56, %s70
      %p72 = scmp.eq.s32.totalorder %s25, 0
      %p73 = por %p71, %p72
      %s75 = sadd.s32 %s74, 1
      %p78 = scmp.eq.s32.totalorder %s19, 1
      %p79 = scmp.ne.s32.totalorder %s74, %s76
      %p80 = scmp.eq.s32.totalorder %s19, 0
      %p81 = por %p79, %p80
      %p82 = scmp.ne.s32.totalorder %s74, %s76
      %p83 = scmp.eq.s32.totalorder %s24, 1
      %p84 = por %p82, %p83
      %p85 = scmp.ne.s32.totalorder %s76, %s77
      %p86 = scmp.eq.s32.totalorder %s24, 0
      %p87 = por %p85, %p86
      %p88 = scmp.ne.s32.totalorder %s76, %s77
      %p89 = scmp.eq.s32.totalorder %s25, 1
      %p90 = por %p88, %p89
      %p92 = scmp.ne.s32.totalorder %s77, %s91
      %p93 = scmp.eq.s32.totalorder %s25, 0
      %p94 = por %p92, %p93
      %s96 = sadd.s32 %s95, 1
      %p99 = scmp.eq.s32.totalorder %s19, 1
      %p100 = scmp.ne.s32.totalorder %s95, %s97
      %p101 = scmp.eq.s32.totalorder %s19, 0
      %p102 = por %p100, %p101
      %p103 = scmp.ne.s32.totalorder %s95, %s97
      %p104 = scmp.eq.s32.totalorder %s24, 1
      %p105 = por %p103, %p104
      %p106 = scmp.ne.s32.totalorder %s97, %s98
      %p107 = scmp.eq.s32.totalorder %s24, 0
      %p108 = por %p106, %p107
      %p109 = scmp.ne.s32.totalorder %s97, %s98
      %p110 = scmp.eq.s32.totalorder %s25, 1
      %p111 = por %p109, %p110
      %p113 = scmp.ne.s32.totalorder %s98, %s112
      %p114 = scmp.eq.s32.totalorder %s25, 0
      %p115 = por %p113, %p114
      %s117 = sadd.s32 %s116, 1
      %p120 = scmp.eq.s32.totalorder %s19, 1
      %p121 = scmp.ne.s32.totalorder %s116, %s118
      %p122 = scmp.eq.s32.totalorder %s19, 0
      %p123 = por %p121, %p122
      %p124 = scmp.ne.s32.totalorder %s116, %s118
      %p125 = scmp.eq.s32.totalorder %s24, 1
      %p126 = por %p124, %p125
      %p127 = scmp.ne.s32.totalorder %s118, %s119
      %p128 = scmp.eq.s32.totalorder %s24, 0
      %p129 = por %p127, %p128
      %p130 = scmp.ne.s32.totalorder %s118, %s119
      %p131 = scmp.eq.s32.totalorder %s25, 1
      %p132 = por %p130, %p131
      %p134 = scmp.ne.s32.totalorder %s119, %s133
      %p135 = scmp.eq.s32.totalorder %s25, 0
      %p136 = por %p134, %p135
      %s137 = ssub.s32 %s19, %s26
      %p138 = scmp.eq.s32.totalorder %s137, 0
      %s140 = sadd.s32 %s139, 1
      %s141 = scalar_select %p138, %s139, %s140
      %p144 = pneg %p138
      %p145 = scmp.eq.s32.totalorder %s19, 1
      %p146 = por %p144, %p145
      %p147 = scmp.ne.s32.totalorder %s139, %s142
      %p148 = scmp.eq.s32.totalorder %s19, 0
      %p149 = por %p147, %p148
      %p150 = scmp.ne.s32.totalorder %s139, %s142
      %p151 = scmp.eq.s32.totalorder %s24, 1
      %p152 = por %p150, %p151
      %p153 = scmp.ne.s32.totalorder %s142, %s143
      %p154 = scmp.eq.s32.totalorder %s24, 0
      %p155 = por %p153, %p154
      %p156 = scmp.ne.s32.totalorder %s142, %s143
      %p157 = scmp.eq.s32.totalorder %s25, 1
      %p158 = por %p156, %p157
      %p160 = scmp.ne.s32.totalorder %s143, %s159
      %p161 = scmp.eq.s32.totalorder %s25, 0
      %p162 = por %p160, %p161
      %s163 = ssub.s32 %s19, %s26
      %p164 = scmp.eq.s32.totalorder %s163, 0
      %s166 = sadd.s32 %s165, 1
      %s167 = scalar_select %p164, %s165, %s166
      %p170 = pneg %p164
      %p171 = scmp.eq.s32.totalorder %s19, 1
      %p172 = por %p170, %p171
      %p173 = scmp.ne.s32.totalorder %s165, %s168
      %p174 = scmp.eq.s32.totalorder %s19, 0
      %p175 = por %p173, %p174
      %p176 = scmp.ne.s32.totalorder %s165, %s168
      %p177 = scmp.eq.s32.totalorder %s24, 1
      %p178 = por %p176, %p177
      %p179 = scmp.ne.s32.totalorder %s168, %s169
      %p180 = scmp.eq.s32.totalorder %s24, 0
      %p181 = por %p179, %p180
      %p182 = scmp.ne.s32.totalorder %s168, %s169
      %p183 = scmp.eq.s32.totalorder %s25, 1
      %p184 = por %p182, %p183
      %p186 = scmp.ne.s32.totalorder %s169, %s185
      %p187 = scmp.eq.s32.totalorder %s25, 0
      %p188 = por %p186, %p187
      %p189 = scmp.le.s32.totalorder 1, %s19
      %p190 = scmp.lt.s32.totalorder %s19, 3
      %p191 = pnand %p189, %p190
      %p192 = pneg %p191
      // Predicated region
      $region9: #{tpu_custom_call.1} parent=5 // pred_check
        _
      $region10: #{tpu_custom_call.1} parent=5 // pred_check_branch
        %194 = sbr.rel (%p191) target = $region12
      $region11: #{tpu_custom_call.1} parent=5 // pred_region
        %s195 = ssub.s32 %s19, 1
        // Predicated region
        $region13: #{tpu_custom_call.1} parent=11 // pred_check
          %p196 = pneg %p66
        $region14: #{tpu_custom_call.1} parent=11 // pred_check_branch
          %198 = sbr.rel (%p196) target = $region16
        $region15: #{tpu_custom_call.1} parent=11 // pred_region
          _
        $region16: #{tpu_custom_call.1} parent=11 // pred_fallthru
          _
        // Predicated region
        $region17: #{tpu_custom_call.1} parent=11 // pred_check
          %p199 = pneg %p87
        $region18: #{tpu_custom_call.1} parent=11 // pred_check_branch
          %201 = sbr.rel (%p199) target = $region20
        $region19: #{tpu_custom_call.1} parent=11 // pred_region
          _
        $region20: #{tpu_custom_call.1} parent=11 // pred_fallthru
          _
        // Predicated region
        $region21: #{tpu_custom_call.1} parent=11 // pred_check
          %p202 = pneg %p108
        $region22: #{tpu_custom_call.1} parent=11 // pred_check_branch
          %204 = sbr.rel (%p202) target = $region24
        $region23: #{tpu_custom_call.1} parent=11 // pred_region
          _
        $region24: #{tpu_custom_call.1} parent=11 // pred_fallthru
          _
        // Predicated region
        $region25: #{tpu_custom_call.1} parent=11 // pred_check
          %p205 = pneg %p129
        $region26: #{tpu_custom_call.1} parent=11 // pred_check_branch
          %207 = sbr.rel (%p205) target = $region28
        $region27: #{tpu_custom_call.1} parent=11 // pred_region
          _
        $region28: #{tpu_custom_call.1} parent=11 // pred_fallthru
          _
      $region12: #{tpu_custom_call.1} parent=5 // pred_fallthru
        _
      %p208 = scmp.lt.s32.totalorder %s19, 2
      // Predicated region
      $region29: #{tpu_custom_call.1} parent=5 // pred_check
        %p209 = pneg %p208
      $region30: #{tpu_custom_call.1} parent=5 // pred_check_branch
        %211 = sbr.rel (%p209) target = $region32
      $region31: #{tpu_custom_call.1} parent=5 // pred_region
        // Predicated region
        $region33: #{tpu_custom_call.1} parent=31 // pred_check
          %p212 = pneg %p39
        $region34: #{tpu_custom_call.1} parent=31 // pred_check_branch
          %214 = sbr.rel (%p212) target = $region36
        $region35: #{tpu_custom_call.1} parent=31 // pred_region
          %p215 = scmp.lt.s32.totalorder %s19, 1
          %s216 = scalar_select %p215, %s19, 1
          %s217 = smul.addr %s216, 8
          %s218 = scalar_lea.vmem %s0, %s217
        $region36: #{tpu_custom_call.1} parent=31 // pred_fallthru
          _
      $region32: #{tpu_custom_call.1} parent=5 // pred_fallthru
        _
      %p219 = scmp.le.s32.totalorder 1, %s19
      %p220 = scmp.lt.s32.totalorder %s19, 3
      %p221 = pnand %p219, %p220
      %p222 = pneg %p221
      // Predicated region
      $region37: #{tpu_custom_call.1} parent=5 // pred_check
        _
      $region38: #{tpu_custom_call.1} parent=5 // pred_check_branch
        %224 = sbr.rel (%p221) target = $region40
      $region39: #{tpu_custom_call.1} parent=5 // pred_region
        %s225 = ssub.s32 %s19, 1
        %p226 = scmp.lt.s32.totalorder %s24, 1
        %s227 = scalar_select %p226, %s24, 1
        %s228 = smul.addr %s227, 8
        %s229 = scalar_lea.vmem %s0, %s228
        %p230 = pneg %p45
        %p231 = pneg %p42
        %p232 = pneg %p66
        %p233 = pneg %p63
        %p234 = pneg %p87
        %p235 = pneg %p84
        %p236 = pneg %p108
        %p237 = pneg %p105
        %p238 = pneg %p129
        %p239 = pneg %p126
        %p240 = pneg %p155
        %p241 = pneg %p152
        %s242 = sand.u32 %s142, 1
        %s243 = scalar_lea.sflag [#allocation3], %s242
        %s244 = sand.u32 %s142, 1
        %s245 = smul.addr %s244, 16
        %s246 = scalar_lea.vmem [#allocation2], %s245
        %p247 = pneg %p181
        %p248 = pneg %p178
        %s249 = sand.u32 %s168, 1
        %s250 = scalar_lea.sflag [#allocation5], %s249
        %s251 = sand.u32 %s168, 1
        %s252 = smul.addr %s251, 32
        %s253 = scalar_lea.vmem [#allocation4], %s252
        %p254 = scmp.lt.s32.totalorder %s24, 1
        %s255 = scalar_select %p254, %s24, 1
        %s256 = smul.addr %s255, 8
        %s257 = scalar_lea.vmem %s0, %s256
        %v258 = vld [vmem:[%s257] sm:$0xff]
        %v259 = vld [vmem:[%s2] sm:$0xff]
        %vm260 = vcmask 64512
        %v262 = vsel %vm260, %v258, 0
        %264 = vmatpush.msra.mxu0 0.0
        %265 = vmatpush.msra.mxu0 0.0
        %266 = vmatpush.msra.mxu0 0.0
        %267 = vmatpush.msra.mxu0 0.0
        %268 = vmatpush.msra.mxu0 0.0
        %269 = vmatpush.msra.mxu0 0.0
        %270 = vmatpush.msra.mxu0 0.0
        %271 = vmatpush.msra.mxu0 0.0
        %272 = vmatpush.msra.mxu0 0.0
        %273 = vmatpush.msra.mxu0 0.0
        %274 = vmatpush.msra.mxu0 0.0
        %275 = vmatpush.msra.mxu0 0.0
        %276 = vmatpush.msra.mxu0 0.0
        %277 = vmatpush.msra.mxu0 0.0
        %278 = vmatpush.msra.mxu0 0.0
        %279 = vmatpush.msra.mxu0 %v259
        %280 = vmatmul.f32.gmra.mxu0 %v262
        %v281 = vpop.f32.mrf.mxu0
        %v282 = vadd.f32 0.0, %v281
        %283 = vdwg.mxu0
        %v284 = vld [vmem:[%s1] sm:$0xff]
        %v285 = vld [vmem:[%s1 + $0x8] sm:$0xff]
        %v287 = vsel %vm260, %v284, 0
        %v290 = vsel %vm260, %v285, 0
        %292 = vmatpush.msra.mxu0 0.0
        %293 = vmatpush.msra.mxu0 0.0
        %294 = vmatpush.msra.mxu0 0.0
        %295 = vmatpush.msra.mxu0 0.0
        %296 = vmatpush.msra.mxu0 0.0
        %297 = vmatpush.msra.mxu0 0.0
        %298 = vmatpush.msra.mxu0 0.0
        %299 = vmatpush.msra.mxu0 0.0
        %300 = vmatpush.msra.mxu0 0.0
        %301 = vmatpush.msra.mxu0 0.0
        %302 = vmatpush.msra.mxu0 0.0
        %303 = vmatpush.msra.mxu0 0.0
        %304 = vmatpush.msra.mxu0 0.0
        %305 = vmatpush.msra.mxu0 0.0
        %306 = vmatpush.msra.mxu0 0.0
        %307 = vmatpush.msra.mxu0 %v282
        %308 = vmatmul.f32.gmra.mxu0 %v287
        %v309 = vpop.f32.mrf.mxu0
        %v310 = vadd.f32 0.0, %v309
        %311 = vmatmul.f32.gmra.mxu0 %v290
        %v312 = vpop.f32.mrf.mxu0
        %v313 = vadd.f32 0.0, %v312
        %314 = vdwg.mxu0
        %vm315 = vcmask 130048
        %316 = vst.msk [vmem:[%s246] sm:$0xff] %vm315, %v310
        %317 = vst.msk [vmem:[%s246 + $0x8] sm:$0xff] %vm315, %v313
        %v318 = vld [vmem:[%s4] sm:$0xff]
        %319 = vmatpush.msra.mxu0 0.0
        %320 = vmatpush.msra.mxu0 0.0
        %321 = vmatpush.msra.mxu0 0.0
        %322 = vmatpush.msra.mxu0 0.0
        %323 = vmatpush.msra.mxu0 0.0
        %324 = vmatpush.msra.mxu0 0.0
        %325 = vmatpush.msra.mxu0 0.0
        %326 = vmatpush.msra.mxu0 0.0
        %327 = vmatpush.msra.mxu0 0.0
        %328 = vmatpush.msra.mxu0 0.0
        %329 = vmatpush.msra.mxu0 0.0
        %330 = vmatpush.msra.mxu0 0.0
        %331 = vmatpush.msra.mxu0 0.0
        %332 = vmatpush.msra.mxu0 0.0
        %333 = vmatpush.msra.mxu0 0.0
        %334 = vmatpush.msra.mxu0 %v318
        %335 = vmatmul.f32.gmra.mxu0 %v262
        %v336 = vpop.f32.mrf.mxu0
        %v337 = vadd.f32 0.0, %v336
        %338 = vdwg.mxu0
        %v339 = vld [vmem:[%s3] sm:$0xff]
        %v340 = vld [vmem:[%s3 + $0x8] sm:$0xff]
        %v341 = vld [vmem:[%s3 + $0x10] sm:$0xff]
        %v342 = vld [vmem:[%s3 + $0x18] sm:$0xff]
        %v344 = vsel %vm260, %v339, 0
        %v347 = vsel %vm260, %v340, 0
        %v350 = vsel %vm260, %v341, 0
        %v353 = vsel %vm260, %v342, 0
        %355 = vmatpush.msra.mxu0 0.0
        %356 = vmatpush.msra.mxu0 0.0
        %357 = vmatpush.msra.mxu0 0.0
        %358 = vmatpush.msra.mxu0 0.0
        %359 = vmatpush.msra.mxu0 0.0
        %360 = vmatpush.msra.mxu0 0.0
        %361 = vmatpush.msra.mxu0 0.0
        %362 = vmatpush.msra.mxu0 0.0
        %363 = vmatpush.msra.mxu0 0.0
        %364 = vmatpush.msra.mxu0 0.0
        %365 = vmatpush.msra.mxu0 0.0
        %366 = vmatpush.msra.mxu0 0.0
        %367 = vmatpush.msra.mxu0 0.0
        %368 = vmatpush.msra.mxu0 0.0
        %369 = vmatpush.msra.mxu0 0.0
        %370 = vmatpush.msra.mxu0 %v337
        %371 = vmatmul.f32.gmra.mxu0 %v344
        %v372 = vpop.f32.mrf.mxu0
        %v373 = vadd.f32 0.0, %v372
        %374 = vmatmul.f32.gmra.mxu0 %v347
        %v375 = vpop.f32.mrf.mxu0
        %v376 = vadd.f32 0.0, %v375
        %377 = vmatmul.f32.gmra.mxu0 %v350
        %v378 = vpop.f32.mrf.mxu0
        %v379 = vadd.f32 0.0, %v378
        %380 = vmatmul.f32.gmra.mxu0 %v353
        %v381 = vpop.f32.mrf.mxu0
        %v382 = vadd.f32 0.0, %v381
        %383 = vdwg.mxu0
        %vm384 = vcmask 261120
        %385 = vst.msk [vmem:[%s253] sm:$0xff] %vm384, %v373
        %386 = vst.msk [vmem:[%s253 + $0x8] sm:$0xff] %vm384, %v376
        %387 = vst.msk [vmem:[%s253 + $0x10] sm:$0xff] %vm384, %v379
        %388 = vst.msk [vmem:[%s253 + $0x18] sm:$0xff] %vm384, %v382
        %s389 = sand.u32 %s142, 1
        %s390 = scalar_lea.sflag [#allocation3], %s389
        %s391 = sand.u32 %s142, 1
        %s392 = smul.addr %s391, 16
        %s393 = scalar_lea.vmem [#allocation2], %s392
        %s394 = sand.u32 %s168, 1
        %s395 = scalar_lea.sflag [#allocation5], %s394
        %s396 = sand.u32 %s168, 1
        %s397 = smul.addr %s396, 32
        %s398 = scalar_lea.vmem [#allocation4], %s397
        // Predicated region
        $region41: #{tpu_custom_call.1} parent=39 // pred_check
          %p399 = pneg %p152
        $region42: #{tpu_custom_call.1} parent=39 // pred_check_branch
          %401 = sbr.rel (%p399) target = $region44
        $region43: #{tpu_custom_call.1} parent=39 // pred_region
          %403 = vsyncadd %s390, 0
          %s404 = smul.addr %s24, 2
          %s405 = smul.addr %s404, 8
          %s406 = scalar_lea.hbm %s5, %s405
          %s407 = sshll.u32 %s393, 4
          %s408 = int_to_ptr.vmem [resolvable:$true] %s407
          %s409 = sshll.u32 %s406, 4
          %s410 = int_to_ptr.hbm [resolvable:$true] %s409
          %415 = dma.vmem_to_hbm [thread:$0]  %s408, 256, %s410, %s390, 128, 128, 8
        $region44: #{tpu_custom_call.1} parent=39 // pred_fallthru
          _
        // Predicated region
        $region45: #{tpu_custom_call.1} parent=39 // pred_check
          %p416 = pneg %p178
        $region46: #{tpu_custom_call.1} parent=39 // pred_check_branch
          %418 = sbr.rel (%p416) target = $region48
        $region47: #{tpu_custom_call.1} parent=39 // pred_region
          %420 = vsyncadd %s395, 0
          %s421 = smul.addr %s24, 4
          %s422 = smul.addr %s421, 8
          %s423 = scalar_lea.hbm %s6, %s422
          %s424 = sshll.u32 %s398, 4
          %s425 = int_to_ptr.vmem [resolvable:$true] %s424
          %s426 = sshll.u32 %s423, 4
          %s427 = int_to_ptr.hbm [resolvable:$true] %s426
          %432 = dma.vmem_to_hbm [thread:$0]  %s425, 512, %s427, %s395, 128, 128, 8
        $region48: #{tpu_custom_call.1} parent=39 // pred_fallthru
          _
      $region40: #{tpu_custom_call.1} parent=5 // pred_fallthru
        _
      %p433 = scmp.le.s32.totalorder 2, %s19
      // Predicated region
      $region49: #{tpu_custom_call.1} parent=5 // pred_check
        %p434 = pneg %p433
      $region50: #{tpu_custom_call.1} parent=5 // pred_check_branch
        %436 = sbr.rel (%p434) target = $region52
      $region51: #{tpu_custom_call.1} parent=5 // pred_region
        %s437 = ssub.s32 %s19, 2
        // Predicated region
        $region53: #{tpu_custom_call.1} parent=51 // pred_check
          %p438 = pneg %p158
        $region54: #{tpu_custom_call.1} parent=51 // pred_check_branch
          %440 = sbr.rel (%p438) target = $region56
        $region55: #{tpu_custom_call.1} parent=51 // pred_region
          %s441 = sand.u32 %s143, 1
          %s442 = scalar_lea.sflag [#allocation3], %s441
          %s443 = sand.u32 %s143, 1
          %s444 = smul.addr %s443, 16
          %s445 = scalar_lea.vmem [#allocation2], %s444
          %447 = dma.done %s442, 256
        $region56: #{tpu_custom_call.1} parent=51 // pred_fallthru
          _
        // Predicated region
        $region57: #{tpu_custom_call.1} parent=51 // pred_check
          %p448 = pneg %p184
        $region58: #{tpu_custom_call.1} parent=51 // pred_check_branch
          %450 = sbr.rel (%p448) target = $region60
        $region59: #{tpu_custom_call.1} parent=51 // pred_region
          %s451 = sand.u32 %s169, 1
          %s452 = scalar_lea.sflag [#allocation5], %s451
          %s453 = sand.u32 %s169, 1
          %s454 = smul.addr %s453, 32
          %s455 = scalar_lea.vmem [#allocation4], %s454
          %457 = dma.done %s452, 512
        $region60: #{tpu_custom_call.1} parent=51 // pred_fallthru
          _
      $region52: #{tpu_custom_call.1} parent=5 // pred_fallthru
        _
    $region6: #{tpu_custom_call.1} parent=1 // loop_footer
      %s23 = sadd.s32 1, %s19
    $region7: #{tpu_custom_call.1} parent=1 // loop_footer_branch
      %18 = sbr.rel target = $region3
    $region8: #{tpu_custom_call.1} parent=1 // loop_exit
      _
    %458 = vsyncpa [#allocation3], 1
    %s459 = scalar_lea.sflag [#allocation3], 1
    %460 = vsyncpa %s459, 1
    %461 = vsyncpa [#allocation5], 1
    %s462 = scalar_lea.sflag [#allocation5], 1
    %463 = vsyncpa %s462, 1

</llo_original>
